<compile_context>
chip_gen: v7x
topology: tpu7x:2x2x1
jax: 0.10.0
libtpu: 0.0.40
codegen_flags: <defaults>
</compile_context>

<pallas_src>
import functools

import jax
import jax.numpy as jnp
from jax.experimental import pallas as pl
from jax.experimental.pallas import tpu as pltpu

GAMMA = 1.5
ALPHA = 0.25
LANES = 128
ACC_ROWS = 64            # accumulator rows: 8 independent (8,128) f32 vregs
SENTINEL_LOGIT = -100.0  # focal loss(pred=-100, true=0) == 0 exactly in f32


def _round_up(x, m):
    return ((x + m - 1) // m) * m


def _num_tensorcores():
    """2 on chips exposing two TensorCores per JAX device (v4/v5p/v7x), else 1."""
    try:
        kind = jax.devices()[0].device_kind.lower()
    except Exception:
        return 1
    return 2 if any(tag in kind for tag in ("v4", "v5p", "v7")) else 1


def _focal_loss_kernel(pred_ref, true_ref, out_ref, acc_ref, *,
                       gamma, alpha, rows_total, tile_rows, has_tail, has_idle):
    step = pl.program_id(1)

    @pl.when(step == 0)
    def _():
        acc_ref[...] = jnp.zeros_like(acc_ref)

    x = pred_ref[...].astype(jnp.float32)
    t = true_ref[...].astype(jnp.float32)

    # One exp per element, shared by BCE and the sigmoid.
    e = jnp.exp(-jnp.abs(x))                               # EUP
    bce = jnp.maximum(x, 0.0) - x * t + jnp.log1p(e)       # EUP (log)

    # sigmoid(x) = [x >= 0 ? 1 : e] / (1 + e); approx reciprocal + 1 Newton step.
    d = 1.0 + e
    r = pl.reciprocal(d, approx=True)                      # EUP (vrcp)
    r = r * (2.0 - d * r)                                  # Newton: ~f32 accuracy
    p = jnp.where(x >= 0.0, 1.0, e) * r

    # m = 1 - p_t  with  p_t = t*p + (1-t)*(1-p);  af = t*a + (1-t)*(1-a)
    m = p + t * (1.0 - 2.0 * p)
    af = (1.0 - alpha) + t * (2.0 * alpha - 1.0)

    if gamma == 1.5:
        mf = m * jnp.sqrt(m)                               # EUP (sqrt)
    elif gamma == 2.0:
        mf = m * m
    elif gamma == 1.0:
        mf = m
    else:
        # exp(g*log(m)) path; guard m == 0 against NaN.
        mf = jnp.where(m > 0.0,
                       jnp.exp(jnp.float32(gamma) * jnp.log(jnp.maximum(m, 1e-38))),
                       0.0)

    loss = bce * (af * mf)

    def accumulate(v):
        # (tile_rows,128) -> (tile_rows/64, 64, 128): 8 independent per-vreg
        # add chains instead of one serial chain into a single (8,128) vreg.
        acc_ref[...] += v.reshape(-1, ACC_ROWS, LANES).sum(axis=0)

    if not (has_tail or has_idle):
        accumulate(loss)                                   # hot path: no masking
    else:
        block_idx = pl.program_id(0) * pl.num_programs(1) + step
        row0 = block_idx * tile_rows
        is_full = row0 + tile_rows <= rows_total

        @pl.when(is_full)
        def _():
            accumulate(loss)

        if has_tail:
            # Only the single ragged boundary block pays for the row mask.
            is_partial = jnp.logical_and(row0 < rows_total,
                                         row0 + tile_rows > rows_total)

            @pl.when(is_partial)
            def _():
                rid = jax.lax.broadcasted_iota(jnp.int32, loss.shape, 0)
                accumulate(jnp.where(rid < rows_total - row0, loss, 0.0))

    @pl.when(step == pl.num_programs(1) - 1)
    def _():
        out_ref[...] = acc_ref[...].reshape(out_ref.shape)


def focal_loss(pred, true, gamma=GAMMA, alpha=ALPHA,
               tile_rows=8192, num_shards=None):
    """Focal loss with BCE-with-logits base, 'mean' reduction. Any shape/dtype."""
    assert pred.shape == true.shape
    total_n = pred.size
    if total_n == 0:                       # torch: mean of an empty tensor is nan
        return jnp.float32(jnp.nan)

    flat_p = pred.reshape(-1)              # reshape of contiguous data: no copy
    flat_t = true.reshape(-1)
    rem = total_n % LANES
    if rem:
        # Tiny (<128 element) sentinel pad so the element tail never needs an
        # in-kernel mask: focal loss(pred=-100, true=0) is exactly 0 in f32.
        pad = LANES - rem
        flat_p = jnp.pad(flat_p, (0, pad), constant_values=SENTINEL_LOGIT)
        flat_t = jnp.pad(flat_t, (0, pad), constant_values=0)
    rows = flat_p.size // LANES
    pred2d = flat_p.reshape(rows, LANES)   # original dtype, no f32 copy
    true2d = flat_t.reshape(rows, LANES)

    if num_shards is None:
        num_shards = _num_tensorcores()

    # Clamp the tile so tiny inputs are not processed with huge, mostly-OOB
    # blocks; keep it a multiple of ACC_ROWS (covers 8/16/32 sublane packing).
    tile_rows = max(ACC_ROWS,
                    min(_round_up(tile_rows, ACC_ROWS),
                        _round_up(pl.cdiv(rows, num_shards), ACC_ROWS)))
    num_blocks = pl.cdiv(rows, tile_rows)
    num_shards = max(1, min(num_shards, num_blocks))
    steps_per_core = pl.cdiv(num_blocks, num_shards)
    has_tail = (rows % tile_rows) != 0                      # ragged last block
    has_idle = steps_per_core * num_shards > num_blocks     # trailing empty slots

    def in_map(c, i):
        b = c * steps_per_core + i
        if has_idle:
            b = jnp.minimum(b, num_blocks - 1)   # idle slots re-read last block
        return (b, 0)

    kernel = functools.partial(
        _focal_loss_kernel, gamma=gamma, alpha=alpha, rows_total=rows,
        tile_rows=tile_rows, has_tail=has_tail, has_idle=has_idle)

    partials = pl.pallas_call(
        kernel,
        out_shape=jax.ShapeDtypeStruct((num_shards, ACC_ROWS, LANES), jnp.float32),
        grid_spec=pltpu.PrefetchScalarGridSpec(
            num_scalar_prefetch=0,
            grid=(num_shards, steps_per_core),
            in_specs=[
                pl.BlockSpec((tile_rows, LANES), in_map),
                pl.BlockSpec((tile_rows, LANES), in_map),
            ],
            out_specs=pl.BlockSpec((1, ACC_ROWS, LANES), lambda c, i: (c, 0, 0)),
            scratch_shapes=[pltpu.VMEM((ACC_ROWS, LANES), jnp.float32)],
        ),
        compiler_params=pltpu.CompilerParams(
            dimension_semantics=("parallel", "arbitrary"),
            vmem_limit_bytes=32 * 1024 * 1024,
        ),
    )(pred2d, true2d)

    # Final cross-lane reduce + shard combine outside the kernel.
    return jnp.sum(partials, dtype=jnp.float32) / jnp.float32(total_n)


def _focal_loss_ref(pred, true, gamma=GAMMA, alpha=ALPHA):
    x = pred.astype(jnp.float32)
    t = true.astype(jnp.float32)
    bce = jnp.maximum(x, 0.0) - x * t + jnp.log1p(jnp.exp(-jnp.abs(x)))
    p = jax.nn.sigmoid(x)
    p_t = t * p + (1 - t) * (1 - p)
    af = t * alpha + (1 - t) * (1 - alpha)
    mf = (1.0 - p_t) ** gamma
    return jnp.mean(bce * af * mf)


if __name__ == "__main__":
    key = jax.random.PRNGKey(0)
    k1, k2, k3, k4 = jax.random.split(key, 4)

    # NCHW logits and binary targets (as in detection objectness/cls heads).
    N, C, H, W = 2, 4, 16, 16
    pred = jax.random.normal(k1, (N, C, H, W), dtype=jnp.float32) * 2.0
    true = (jax.random.uniform(k2, (N, C, H, W)) > 0.7).astype(jnp.float32)

    out = jax.block_until_ready(focal_loss(pred, true))
    ref = _focal_loss_ref(pred, true)
    # approx-reciprocal + one Newton step => ~1e-5-level worst-case rel. error.
    assert jnp.allclose(out, ref, rtol=1e-4, atol=1e-6), (out, ref)

    # Ragged size (not a multiple of 128) exercises the sentinel-pad tail path.
    pred2 = jax.random.normal(k3, (3, 5, 7), dtype=jnp.float32) * 2.0
    true2 = (jax.random.uniform(k4, (3, 5, 7)) > 0.5).astype(jnp.float32)
    out2 = jax.block_until_ready(focal_loss(pred2, true2))
    ref2 = _focal_loss_ref(pred2, true2)
    assert jnp.allclose(out2, ref2, rtol=1e-4, atol=1e-6), (out2, ref2)

    print("KERNEL_OK")
</pallas_src>

<mosaic_0001>
module attributes {stable_mosaic.version = 11 : i64} {
  func.func @_focal_loss_kernel(%arg0: i32, %arg1: i32, %arg2: memref<64x128xf32, #tpu.memory_space<vmem>>, %arg3: memref<64x128xf32, #tpu.memory_space<vmem>>, %arg4: memref<1x64x128xf32, #tpu.memory_space<vmem>>, %arg5: memref<64x128xf32, #tpu.memory_space<vmem>>) attributes {dimension_semantics = [#tpu.dimension_semantics<parallel>, #tpu.dimension_semantics<arbitrary>], iteration_bounds = array<i64: 1, 1>, scalar_prefetch = 0 : i64, scratch_operands = 1 : i64, tpu.core_type = #tpu.core_type<tc>, window_params = [{transform_indices = @transform_0, window_bounds = array<i64: 64, 128>}, {transform_indices = @transform_1, window_bounds = array<i64: 64, 128>}, {transform_indices = @transform_2, window_bounds = array<i64: 1, 64, 128>}]} {
    %c0_i32 = arith.constant 0 : i32
    %0 = arith.cmpi eq, %arg1, %c0_i32 : i32
    %1 = arith.extui %0 : i1 to i32
    %c0_i32_0 = arith.constant 0 : i32
    %2 = arith.cmpi ne, %1, %c0_i32_0 : i32
    scf.if %2 {
      %cst_21 = arith.constant 0.000000e+00 : f32
      %57 = vector.broadcast %cst_21 : f32 to vector<64x128xf32>
      %c0_22 = arith.constant 0 : index
      %c0_23 = arith.constant 0 : index
      %58 = vector.load %arg5[%c0_22, %c0_23] : memref<64x128xf32, #tpu.memory_space<vmem>>, vector<64x128xf32>
      tpu.vector_store %arg5[%c0_22, %c0_23], %57 {strides = array<i32>} : memref<64x128xf32, #tpu.memory_space<vmem>>, vector<64x128xf32>,
    } else {
    }
    %c0 = arith.constant 0 : index
    %c0_1 = arith.constant 0 : index
    %3 = vector.load %arg2[%c0, %c0_1] : memref<64x128xf32, #tpu.memory_space<vmem>>, vector<64x128xf32>
    %c0_2 = arith.constant 0 : index
    %c0_3 = arith.constant 0 : index
    %4 = vector.load %arg3[%c0_2, %c0_3] : memref<64x128xf32, #tpu.memory_space<vmem>>, vector<64x128xf32>
    %5 = math.absf %3 : vector<64x128xf32>
    %cst = arith.constant 0.000000e+00 : f32
    %6 = vector.broadcast %cst : f32 to vector<64x128xf32>
    %7 = arith.subf %6, %5 : vector<64x128xf32>
    %8 = math.exp %7 : vector<64x128xf32>
    %cst_4 = arith.constant 0.000000e+00 : f32
    %9 = vector.broadcast %cst_4 : f32 to vector<64x128xf32>
    %10 = arith.maximumf %3, %9 : vector<64x128xf32>
    %11 = arith.mulf %3, %4 : vector<64x128xf32>
    %12 = arith.subf %10, %11 : vector<64x128xf32>
    %13 = math.log1p %8 : vector<64x128xf32>
    %14 = arith.addf %12, %13 : vector<64x128xf32>
    %cst_5 = arith.constant 1.000000e+00 : f32
    %15 = vector.broadcast %cst_5 : f32 to vector<64x128xf32>
    %16 = arith.addf %15, %8 : vector<64x128xf32>
    %17 = tpu.reciprocal %16 {approx = true} : vector<64x128xf32> -> vector<64x128xf32>
    %18 = arith.mulf %16, %17 : vector<64x128xf32>
    %cst_6 = arith.constant 2.000000e+00 : f32
    %19 = vector.broadcast %cst_6 : f32 to vector<64x128xf32>
    %20 = arith.subf %19, %18 : vector<64x128xf32>
    %21 = arith.mulf %17, %20 : vector<64x128xf32>
    %cst_7 = arith.constant 0.000000e+00 : f32
    %22 = vector.broadcast %cst_7 : f32 to vector<64x128xf32>
    %23 = arith.cmpf oge, %3, %22 : vector<64x128xf32>
    %cst_8 = arith.constant 1.000000e+00 : f32
    %24 = vector.broadcast %cst_8 : f32 to vector<64x128xf32>
    %25 = arith.select %23, %24, %8 : vector<64x128xi1>, vector<64x128xf32>
    %26 = arith.mulf %25, %21 : vector<64x128xf32>
    %cst_9 = arith.constant 2.000000e+00 : f32
    %27 = vector.broadcast %cst_9 : f32 to vector<64x128xf32>
    %28 = arith.mulf %27, %26 : vector<64x128xf32>
    %cst_10 = arith.constant 1.000000e+00 : f32
    %29 = vector.broadcast %cst_10 : f32 to vector<64x128xf32>
    %30 = arith.subf %29, %28 : vector<64x128xf32>
    %31 = arith.mulf %4, %30 : vector<64x128xf32>
    %32 = arith.addf %26, %31 : vector<64x128xf32>
    %cst_11 = arith.constant -5.000000e-01 : f32
    %33 = vector.broadcast %cst_11 : f32 to vector<64x128xf32>
    %34 = arith.mulf %4, %33 : vector<64x128xf32>
    %cst_12 = arith.constant 7.500000e-01 : f32
    %35 = vector.broadcast %cst_12 : f32 to vector<64x128xf32>
    %36 = arith.addf %35, %34 : vector<64x128xf32>
    %37 = math.sqrt %32 : vector<64x128xf32>
    %38 = arith.mulf %32, %37 : vector<64x128xf32>
    %39 = arith.mulf %36, %38 : vector<64x128xf32>
    %40 = arith.mulf %14, %39 : vector<64x128xf32>
    %c1_i32 = arith.constant 1 : i32
    %41 = arith.muli %arg0, %c1_i32 : i32
    %42 = arith.addi %41, %arg1 : i32
    %c64_i32 = arith.constant 64 : i32
    %43 = arith.muli %42, %c64_i32 : i32
    %c64_i32_13 = arith.constant 64 : i32
    %44 = arith.addi %43, %c64_i32_13 : i32
    %c16_i32 = arith.constant 16 : i32
    %45 = arith.cmpi sle, %44, %c16_i32 : i32
    %46 = arith.extui %45 : i1 to i32
    %c0_i32_14 = arith.constant 0 : i32
    %47 = arith.cmpi ne, %46, %c0_i32_14 : i32
    scf.if %47 {
      %c0_21 = arith.constant 0 : index
      %c0_22 = arith.constant 0 : index
      %57 = vector.load %arg5[%c0_21, %c0_22] : memref<64x128xf32, #tpu.memory_space<vmem>>, vector<64x128xf32>
      %58 = vector.shape_cast %40 : vector<64x128xf32> to vector<1x64x128xf32>
      %cst_23 = arith.constant dense<0.000000e+00> : vector<64x128xf32>
      %59 = vector.multi_reduction <add>, %58, %cst_23 [0] : vector<1x64x128xf32> to vector<64x128xf32>
      %60 = arith.addf %57, %59 : vector<64x128xf32>
      %c0_24 = arith.constant 0 : index
      %c0_25 = arith.constant 0 : index
      %61 = vector.load %arg5[%c0_24, %c0_25] : memref<64x128xf32, #tpu.memory_space<vmem>>, vector<64x128xf32>
      tpu.vector_store %arg5[%c0_24, %c0_25], %60 {strides = array<i32>} : memref<64x128xf32, #tpu.memory_space<vmem>>, vector<64x128xf32>,
    } else {
    }
    %c16_i32_15 = arith.constant 16 : i32
    %48 = arith.cmpi slt, %43, %c16_i32_15 : i32
    %c64_i32_16 = arith.constant 64 : i32
    %49 = arith.addi %43, %c64_i32_16 : i32
    %c16_i32_17 = arith.constant 16 : i32
    %50 = arith.cmpi sgt, %49, %c16_i32_17 : i32
    %51 = arith.andi %48, %50 : i1
    %52 = arith.extui %51 : i1 to i32
    %c0_i32_18 = arith.constant 0 : i32
    %53 = arith.cmpi ne, %52, %c0_i32_18 : i32
    scf.if %53 {
      %57 = tpu.iota {dimensions = array<i32: 0>} : vector<64x128xi32>
      %c16_i32_21 = arith.constant 16 : i32
      %58 = arith.subi %c16_i32_21, %43 : i32
      %59 = vector.broadcast %58 : i32 to vector<64x128xi32>
      %60 = arith.cmpi slt, %57, %59 : vector<64x128xi32>
      %cst_22 = arith.constant 0.000000e+00 : f32
      %61 = vector.broadcast %cst_22 : f32 to vector<64x128xf32>
      %62 = arith.select %60, %40, %61 : vector<64x128xi1>, vector<64x128xf32>
      %c0_23 = arith.constant 0 : index
      %c0_24 = arith.constant 0 : index
      %63 = vector.load %arg5[%c0_23, %c0_24] : memref<64x128xf32, #tpu.memory_space<vmem>>, vector<64x128xf32>
      %64 = vector.shape_cast %62 : vector<64x128xf32> to vector<1x64x128xf32>
      %cst_25 = arith.constant dense<0.000000e+00> : vector<64x128xf32>
      %65 = vector.multi_reduction <add>, %64, %cst_25 [0] : vector<1x64x128xf32> to vector<64x128xf32>
      %66 = arith.addf %63, %65 : vector<64x128xf32>
      %c0_26 = arith.constant 0 : index
      %c0_27 = arith.constant 0 : index
      %67 = vector.load %arg5[%c0_26, %c0_27] : memref<64x128xf32, #tpu.memory_space<vmem>>, vector<64x128xf32>
      tpu.vector_store %arg5[%c0_26, %c0_27], %66 {strides = array<i32>} : memref<64x128xf32, #tpu.memory_space<vmem>>, vector<64x128xf32>,
    } else {
    }
    %c0_i32_19 = arith.constant 0 : i32
    %54 = arith.cmpi eq, %arg1, %c0_i32_19 : i32
    %55 = arith.extui %54 : i1 to i32
    %c0_i32_20 = arith.constant 0 : i32
    %56 = arith.cmpi ne, %55, %c0_i32_20 : i32
    scf.if %56 {
      %c0_21 = arith.constant 0 : index
      %c0_22 = arith.constant 0 : index
      %57 = vector.load %arg5[%c0_21, %c0_22] : memref<64x128xf32, #tpu.memory_space<vmem>>, vector<64x128xf32>
      %58 = vector.shape_cast %57 : vector<64x128xf32> to vector<1x64x128xf32>
      %c0_23 = arith.constant 0 : index
      %c0_24 = arith.constant 0 : index
      %c0_25 = arith.constant 0 : index
      %59 = vector.load %arg4[%c0_23, %c0_24, %c0_25] : memref<1x64x128xf32, #tpu.memory_space<vmem>>, vector<1x64x128xf32>
      tpu.vector_store %arg4[%c0_23, %c0_24, %c0_25], %58 {strides = array<i32>} : memref<1x64x128xf32, #tpu.memory_space<vmem>>, vector<1x64x128xf32>,
    } else {
    }
    return
  }
  func.func @transform_0(%arg0: i32, %arg1: i32) -> (i32, i32) {
    %c1_i32 = arith.constant 1 : i32
    %0 = arith.muli %arg0, %c1_i32 : i32
    %1 = arith.addi %0, %arg1 : i32
    %c0_i32 = arith.constant 0 : i32
    %c0_i32_0 = arith.constant 0 : i32
    return %1, %c0_i32 : i32, i32
  }
  func.func @transform_1(%arg0: i32, %arg1: i32) -> (i32, i32) {
    %c1_i32 = arith.constant 1 : i32
    %0 = arith.muli %arg0, %c1_i32 : i32
    %1 = arith.addi %0, %arg1 : i32
    %c0_i32 = arith.constant 0 : i32
    %c0_i32_0 = arith.constant 0 : i32
    return %1, %c0_i32 : i32, i32
  }
  func.func @transform_2(%arg0: i32, %arg1: i32) -> (i32, i32, i32) {
    %c0_i32 = arith.constant 0 : i32
    %c0_i32_0 = arith.constant 0 : i32
    %c0_i32_1 = arith.constant 0 : i32
    return %arg0, %c0_i32, %c0_i32_0 : i32, i32, i32
  }
}

</mosaic_0001>

<llo_original>
// kernel: tpu_custom_call.1
$region0: #{tpu_custom_call.1}
  #allocation0 [shape = 'u32[]', space=smem, size = 0x4, offset = 0x4, fixed_abs, tag = 'smem constant byte address 0x4 - core index']
  #allocation1 [shape = 'u32[144,128]{1,0:T(1,128)}', space=vmem, size = 0x12000, scoped, tag = 'internal scratch']
  #allocation2 [shape = 'f32[64,128]{1,0:T(8,128)}', space=vmem, size = 0x8000, scoped, tag = 'scratch operand']
  %s0 = inlined_call_operand.hbm [shape: f32[16,128], index: 0, kind: input, shape index: {}]
  %s1 = inlined_call_operand.hbm [shape: f32[16,128], index: 1, kind: input, shape index: {}]
  %s2 = inlined_call_operand.hbm [shape: f32[1,64,128], index: 2, kind: output, shape index: {}]
  %s3 = sld [smem:[#allocation0]]
  $region42: #{tpu_custom_call.1} parent=0
    _
  %s5 = ssub.s32 1, %s3
  %s6 = scalar_select 0, %s5, %s3
  $region1: #{tpu_custom_call.1} parent=0
    #allocation3 [shape = 'u8[32768]{0}', space=vmem, size = 0x8000, scoped, tag = 'input window, operand 0, single buffered']
    #allocation4 [shape = 's32[1]{0}', space=sflag, size = 0x4, scoped, tag = 'scoped memory for tpu_custom_call.1']
    #allocation5 [shape = 's32[1]{0}', space=sflag, size = 0x4, scoped, tag = 'scoped memory for tpu_custom_call.1']
    #allocation6 [shape = 'u8[32768]{0}', space=vmem, size = 0x8000, scoped, tag = 'input window, operand 1, single buffered']
    #allocation7 [shape = 's32[1]{0}', space=sflag, size = 0x4, scoped, tag = 'scoped memory for tpu_custom_call.1']
    #allocation8 [shape = 'u8[32768]{0}', space=vmem, size = 0x8000, scoped, tag = 'output window, operand 0, single buffered']
    %7 = vsyncpa [#allocation4], 0
    %8 = vsyncpa [#allocation7], 0
    %9 = vsyncpa [#allocation5], 0
    // Predicated region
    $region2: #{tpu_custom_call.1} parent=1 // pred_check
      _
    $region3: #{tpu_custom_call.1} parent=1 // pred_check_branch
      %11 = sbr.rel (0) target = $region5
    $region4: #{tpu_custom_call.1} parent=1 // pred_region
      %s12 = sadd.s32 0, 0
      %s13 = smul.u32 8, %s12
      %s14 = ssub.s32 2, %s13
      %s15 = smul.u32 128, %s14
      %s17 = ssub.s32 1024, %s15
      %18 = vsyncadd [#allocation4], %s17
      %p19 = scmp.ne.s32.totalorder 0, %s15
      %s20 = smul.addr %s13, 128
      %s21 = scalar_lea.hbm %s0, %s20
      %s22 = smul.u32 8, %s14
      %s23 = sshll.u32 [#allocation3], 4
      %s24 = int_to_ptr.vmem [resolvable:$true] %s23
      %s25 = sshll.u32 %s22, 4
      %29 = dma.hbm_to_vmem [thread:$0]  (%p19), %s21, %s25, %s24, [#allocation4], 128, 128, 8
    $region5: #{tpu_custom_call.1} parent=1 // pred_fallthru
      _
    // Predicated region
    $region6: #{tpu_custom_call.1} parent=1 // pred_check
      _
    $region7: #{tpu_custom_call.1} parent=1 // pred_check_branch
      %31 = sbr.rel (0) target = $region9
    $region8: #{tpu_custom_call.1} parent=1 // pred_region
      %s32 = sadd.s32 0, 0
      %s33 = smul.u32 8, %s32
      %s34 = ssub.s32 2, %s33
      %s35 = smul.u32 128, %s34
      %s37 = ssub.s32 1024, %s35
      %38 = vsyncadd [#allocation7], %s37
      %p39 = scmp.ne.s32.totalorder 0, %s35
      %s40 = smul.addr %s33, 128
      %s41 = scalar_lea.hbm %s1, %s40
      %s42 = smul.u32 8, %s34
      %s43 = sshll.u32 [#allocation6], 4
      %s44 = int_to_ptr.vmem [resolvable:$true] %s43
      %s45 = sshll.u32 %s42, 4
      %49 = dma.hbm_to_vmem [thread:$0]  (%p39), %s41, %s45, %s44, [#allocation7], 128, 128, 8
    $region9: #{tpu_custom_call.1} parent=1 // pred_fallthru
      _
    // Predicated region
    $region10: #{tpu_custom_call.1} parent=1 // pred_check
      _
    $region11: #{tpu_custom_call.1} parent=1 // pred_check_branch
      %51 = sbr.rel (0) target = $region13
    $region12: #{tpu_custom_call.1} parent=1 // pred_region
      %52 = dma.done [#allocation4], 1024
    $region13: #{tpu_custom_call.1} parent=1 // pred_fallthru
      _
    // Predicated region
    $region14: #{tpu_custom_call.1} parent=1 // pred_check
      _
    $region15: #{tpu_custom_call.1} parent=1 // pred_check_branch
      %54 = sbr.rel (0) target = $region17
    $region16: #{tpu_custom_call.1} parent=1 // pred_region
      %55 = dma.done [#allocation7], 1024
    $region17: #{tpu_custom_call.1} parent=1 // pred_fallthru
      _
    %s56 = sadd.s32 0, 0
    %s57 = smul.u32 8, %s56
    %s58 = ssub.s32 2, %s57
    %s59 = smul.u32 128, %s58
    %s60 = sadd.s32 0, 0
    %s61 = smul.u32 8, %s60
    %s62 = ssub.s32 2, %s61
    %s63 = smul.u32 128, %s62
    %p64 = scmp.eq.s32.totalorder 0, 0
    // Predicated region
    $region18: #{tpu_custom_call.1} parent=1 // pred_check
      %p65 = pneg %p64
    $region19: #{tpu_custom_call.1} parent=1 // pred_check_branch
      %67 = sbr.rel (%p65) target = $region21
    $region20: #{tpu_custom_call.1} parent=1 // pred_region
      %68 = vst [vmem:[#allocation2] sm:$0xff] 0.0
      %69 = vst [vmem:[#allocation2 + $0x8] sm:$0xff] 0.0
      %70 = vst [vmem:[#allocation2 + $0x10] sm:$0xff] 0.0
      %71 = vst [vmem:[#allocation2 + $0x18] sm:$0xff] 0.0
      %72 = vst [vmem:[#allocation2 + $0x20] sm:$0xff] 0.0
      %73 = vst [vmem:[#allocation2 + $0x28] sm:$0xff] 0.0
      %74 = vst [vmem:[#allocation2 + $0x30] sm:$0xff] 0.0
      %75 = vst [vmem:[#allocation2 + $0x38] sm:$0xff] 0.0
    $region21: #{tpu_custom_call.1} parent=1 // pred_fallthru
      _
    %v76 = vld [vmem:[#allocation3] sm:$0xff]
    %v77 = vld [vmem:[#allocation3 + $0x8] sm:$0xff]
    %v78 = vld [vmem:[#allocation3 + $0x10] sm:$0xff]
    %v79 = vld [vmem:[#allocation3 + $0x18] sm:$0xff]
    %v80 = vld [vmem:[#allocation3 + $0x20] sm:$0xff]
    %v81 = vld [vmem:[#allocation3 + $0x28] sm:$0xff]
    %v82 = vld [vmem:[#allocation3 + $0x30] sm:$0xff]
    %v83 = vld [vmem:[#allocation3 + $0x38] sm:$0xff]
    %v84 = vld [vmem:[#allocation6] sm:$0xff]
    %v85 = vld [vmem:[#allocation6 + $0x8] sm:$0xff]
    %v86 = vld [vmem:[#allocation6 + $0x10] sm:$0xff]
    %v87 = vld [vmem:[#allocation6 + $0x18] sm:$0xff]
    %v88 = vld [vmem:[#allocation6 + $0x20] sm:$0xff]
    %v89 = vld [vmem:[#allocation6 + $0x28] sm:$0xff]
    %v90 = vld [vmem:[#allocation6 + $0x30] sm:$0xff]
    %v91 = vld [vmem:[#allocation6 + $0x38] sm:$0xff]
    %v92 = vand.u32 2147483647, %v76
    %v93 = vand.u32 2147483647, %v77
    %v94 = vand.u32 2147483647, %v78
    %v95 = vand.u32 2147483647, %v79
    %v96 = vand.u32 2147483647, %v80
    %v97 = vand.u32 2147483647, %v81
    %v98 = vand.u32 2147483647, %v82
    %v99 = vand.u32 2147483647, %v83
    %v100 = vsub.f32 0.0, %v92
    %v101 = vsub.f32 0.0, %v93
    %v102 = vsub.f32 0.0, %v94
    %v103 = vsub.f32 0.0, %v95
    %v104 = vsub.f32 0.0, %v96
    %v105 = vsub.f32 0.0, %v97
    %v106 = vsub.f32 0.0, %v98
    %v107 = vsub.f32 0.0, %v99
    %v108 = vmul.f32 %v100, 1.442695
    %v109 = vpow.pop %v108
    %v110 = vmul.f32 %v101, 1.442695
    %v111 = vpow.pop %v110
    %v112 = vmul.f32 %v102, 1.442695
    %v113 = vpow.pop %v112
    %v114 = vmul.f32 %v103, 1.442695
    %v115 = vpow.pop %v114
    %v116 = vmul.f32 %v104, 1.442695
    %v117 = vpow.pop %v116
    %v118 = vmul.f32 %v105, 1.442695
    %v119 = vpow.pop %v118
    %v120 = vmul.f32 %v106, 1.442695
    %v121 = vpow.pop %v120
    %v122 = vmul.f32 %v107, 1.442695
    %v123 = vpow.pop %v122
    %v124 = vmax.f32 %v76, 0.0
    %v125 = vmax.f32 %v77, 0.0
    %v126 = vmax.f32 %v78, 0.0
    %v127 = vmax.f32 %v79, 0.0
    %v128 = vmax.f32 %v80, 0.0
    %v129 = vmax.f32 %v81, 0.0
    %v130 = vmax.f32 %v82, 0.0
    %v131 = vmax.f32 %v83, 0.0
    %v132 = vmul.f32 %v76, %v84
    %v133 = vmul.f32 %v77, %v85
    %v134 = vmul.f32 %v78, %v86
    %v135 = vmul.f32 %v79, %v87
    %v136 = vmul.f32 %v80, %v88
    %v137 = vmul.f32 %v81, %v89
    %v138 = vmul.f32 %v82, %v90
    %v139 = vmul.f32 %v83, %v91
    %v140 = vsub.f32 %v124, %v132
    %v141 = vsub.f32 %v125, %v133
    %v142 = vsub.f32 %v126, %v134
    %v143 = vsub.f32 %v127, %v135
    %v144 = vsub.f32 %v128, %v136
    %v145 = vsub.f32 %v129, %v137
    %v146 = vsub.f32 %v130, %v138
    %v147 = vsub.f32 %v131, %v139
    %v148 = vadd.f32 %v109, 1.0
    %v149 = vlog2.pop %v148
    %v150 = vmul.f32 %v149, 0.6931472
    %v151 = vmul.f32 -0.5, %v109
    %v152 = vadd.f32 %v151, 1.0
    %v153 = vmul.f32 %v152, %v109
    %v154 = vand.u32 2147483647, %v109
    %vm155 = vcmp.lt.f32.partialorder %v154, 0.0004427343
    %v156 = vsel %vm155, %v153, %v150
    %v157 = vadd.f32 %v111, 1.0
    %v158 = vlog2.pop %v157
    %v159 = vmul.f32 %v158, 0.6931472
    %v160 = vmul.f32 -0.5, %v111
    %v161 = vadd.f32 %v160, 1.0
    %v162 = vmul.f32 %v161, %v111
    %v163 = vand.u32 2147483647, %v111
    %vm164 = vcmp.lt.f32.partialorder %v163, 0.0004427343
    %v165 = vsel %vm164, %v162, %v159
    %v166 = vadd.f32 %v113, 1.0
    %v167 = vlog2.pop %v166
    %v168 = vmul.f32 %v167, 0.6931472
    %v169 = vmul.f32 -0.5, %v113
    %v170 = vadd.f32 %v169, 1.0
    %v171 = vmul.f32 %v170, %v113
    %v172 = vand.u32 2147483647, %v113
    %vm173 = vcmp.lt.f32.partialorder %v172, 0.0004427343
    %v174 = vsel %vm173, %v171, %v168
    %v175 = vadd.f32 %v115, 1.0
    %v176 = vlog2.pop %v175
    %v177 = vmul.f32 %v176, 0.6931472
    %v178 = vmul.f32 -0.5, %v115
    %v179 = vadd.f32 %v178, 1.0
    %v180 = vmul.f32 %v179, %v115
    %v181 = vand.u32 2147483647, %v115
    %vm182 = vcmp.lt.f32.partialorder %v181, 0.0004427343
    %v183 = vsel %vm182, %v180, %v177
    %v184 = vadd.f32 %v117, 1.0
    %v185 = vlog2.pop %v184
    %v186 = vmul.f32 %v185, 0.6931472
    %v187 = vmul.f32 -0.5, %v117
    %v188 = vadd.f32 %v187, 1.0
    %v189 = vmul.f32 %v188, %v117
    %v190 = vand.u32 2147483647, %v117
    %vm191 = vcmp.lt.f32.partialorder %v190, 0.0004427343
    %v192 = vsel %vm191, %v189, %v186
    %v193 = vadd.f32 %v119, 1.0
    %v194 = vlog2.pop %v193
    %v195 = vmul.f32 %v194, 0.6931472
    %v196 = vmul.f32 -0.5, %v119
    %v197 = vadd.f32 %v196, 1.0
    %v198 = vmul.f32 %v197, %v119
    %v199 = vand.u32 2147483647, %v119
    %vm200 = vcmp.lt.f32.partialorder %v199, 0.0004427343
    %v201 = vsel %vm200, %v198, %v195
    %v202 = vadd.f32 %v121, 1.0
    %v203 = vlog2.pop %v202
    %v204 = vmul.f32 %v203, 0.6931472
    %v205 = vmul.f32 -0.5, %v121
    %v206 = vadd.f32 %v205, 1.0
    %v207 = vmul.f32 %v206, %v121
    %v208 = vand.u32 2147483647, %v121
    %vm209 = vcmp.lt.f32.partialorder %v208, 0.0004427343
    %v210 = vsel %vm209, %v207, %v204
    %v211 = vadd.f32 %v123, 1.0
    %v212 = vlog2.pop %v211
    %v213 = vmul.f32 %v212, 0.6931472
    %v214 = vmul.f32 -0.5, %v123
    %v215 = vadd.f32 %v214, 1.0
    %v216 = vmul.f32 %v215, %v123
    %v217 = vand.u32 2147483647, %v123
    %vm218 = vcmp.lt.f32.partialorder %v217, 0.0004427343
    %v219 = vsel %vm218, %v216, %v213
    %v220 = vadd.f32 %v140, %v156
    %v221 = vadd.f32 %v141, %v165
    %v222 = vadd.f32 %v142, %v174
    %v223 = vadd.f32 %v143, %v183
    %v224 = vadd.f32 %v144, %v192
    %v225 = vadd.f32 %v145, %v201
    %v226 = vadd.f32 %v146, %v210
    %v227 = vadd.f32 %v147, %v219
    %v228 = vadd.f32 %v109, 1.0
    %v229 = vadd.f32 %v111, 1.0
    %v230 = vadd.f32 %v113, 1.0
    %v231 = vadd.f32 %v115, 1.0
    %v232 = vadd.f32 %v117, 1.0
    %v233 = vadd.f32 %v119, 1.0
    %v234 = vadd.f32 %v121, 1.0
    %v235 = vadd.f32 %v123, 1.0
    %v236 = vrcp.pop %v228
    %v237 = vrcp.pop %v229
    %v238 = vrcp.pop %v230
    %v239 = vrcp.pop %v231
    %v240 = vrcp.pop %v232
    %v241 = vrcp.pop %v233
    %v242 = vrcp.pop %v234
    %v243 = vrcp.pop %v235
    %v244 = vmul.f32 %v228, %v236
    %v245 = vmul.f32 %v229, %v237
    %v246 = vmul.f32 %v230, %v238
    %v247 = vmul.f32 %v231, %v239
    %v248 = vmul.f32 %v232, %v240
    %v249 = vmul.f32 %v233, %v241
    %v250 = vmul.f32 %v234, %v242
    %v251 = vmul.f32 %v235, %v243
    %v252 = vsub.f32 2.0, %v244
    %v253 = vsub.f32 2.0, %v245
    %v254 = vsub.f32 2.0, %v246
    %v255 = vsub.f32 2.0, %v247
    %v256 = vsub.f32 2.0, %v248
    %v257 = vsub.f32 2.0, %v249
    %v258 = vsub.f32 2.0, %v250
    %v259 = vsub.f32 2.0, %v251
    %v260 = vmul.f32 %v236, %v252
    %v261 = vmul.f32 %v237, %v253
    %v262 = vmul.f32 %v238, %v254
    %v263 = vmul.f32 %v239, %v255
    %v264 = vmul.f32 %v240, %v256
    %v265 = vmul.f32 %v241, %v257
    %v266 = vmul.f32 %v242, %v258
    %v267 = vmul.f32 %v243, %v259
    %vm268 = vcmp.ge.f32.partialorder %v76, 0.0
    %vm269 = vcmp.ge.f32.partialorder %v77, 0.0
    %vm270 = vcmp.ge.f32.partialorder %v78, 0.0
    %vm271 = vcmp.ge.f32.partialorder %v79, 0.0
    %vm272 = vcmp.ge.f32.partialorder %v80, 0.0
    %vm273 = vcmp.ge.f32.partialorder %v81, 0.0
    %vm274 = vcmp.ge.f32.partialorder %v82, 0.0
    %vm275 = vcmp.ge.f32.partialorder %v83, 0.0
    %v276 = vsel %vm268, 1.0, %v109
    %v277 = vsel %vm269, 1.0, %v111
    %v278 = vsel %vm270, 1.0, %v113
    %v279 = vsel %vm271, 1.0, %v115
    %v280 = vsel %vm272, 1.0, %v117
    %v281 = vsel %vm273, 1.0, %v119
    %v282 = vsel %vm274, 1.0, %v121
    %v283 = vsel %vm275, 1.0, %v123
    %v284 = vmul.f32 %v276, %v260
    %v285 = vmul.f32 %v277, %v261
    %v286 = vmul.f32 %v278, %v262
    %v287 = vmul.f32 %v279, %v263
    %v288 = vmul.f32 %v280, %v264
    %v289 = vmul.f32 %v281, %v265
    %v290 = vmul.f32 %v282, %v266
    %v291 = vmul.f32 %v283, %v267
    %v292 = vmul.f32 %v284, 2.0
    %v293 = vmul.f32 %v285, 2.0
    %v294 = vmul.f32 %v286, 2.0
    %v295 = vmul.f32 %v287, 2.0
    %v296 = vmul.f32 %v288, 2.0
    %v297 = vmul.f32 %v289, 2.0
    %v298 = vmul.f32 %v290, 2.0
    %v299 = vmul.f32 %v291, 2.0
    %v300 = vsub.f32 1.0, %v292
    %v301 = vsub.f32 1.0, %v293
    %v302 = vsub.f32 1.0, %v294
    %v303 = vsub.f32 1.0, %v295
    %v304 = vsub.f32 1.0, %v296
    %v305 = vsub.f32 1.0, %v297
    %v306 = vsub.f32 1.0, %v298
    %v307 = vsub.f32 1.0, %v299
    %v308 = vmul.f32 %v84, %v300
    %v309 = vmul.f32 %v85, %v301
    %v310 = vmul.f32 %v86, %v302
    %v311 = vmul.f32 %v87, %v303
    %v312 = vmul.f32 %v88, %v304
    %v313 = vmul.f32 %v89, %v305
    %v314 = vmul.f32 %v90, %v306
    %v315 = vmul.f32 %v91, %v307
    %v316 = vadd.f32 %v284, %v308
    %v317 = vadd.f32 %v285, %v309
    %v318 = vadd.f32 %v286, %v310
    %v319 = vadd.f32 %v287, %v311
    %v320 = vadd.f32 %v288, %v312
    %v321 = vadd.f32 %v289, %v313
    %v322 = vadd.f32 %v290, %v314
    %v323 = vadd.f32 %v291, %v315
    %v324 = vmul.f32 %v84, -0.5
    %v325 = vmul.f32 %v85, -0.5
    %v326 = vmul.f32 %v86, -0.5
    %v327 = vmul.f32 %v87, -0.5
    %v328 = vmul.f32 %v88, -0.5
    %v329 = vmul.f32 %v89, -0.5
    %v330 = vmul.f32 %v90, -0.5
    %v331 = vmul.f32 %v91, -0.5
    %v332 = vadd.f32 %v324, 0.75
    %v333 = vadd.f32 %v325, 0.75
    %v334 = vadd.f32 %v326, 0.75
    %v335 = vadd.f32 %v327, 0.75
    %v336 = vadd.f32 %v328, 0.75
    %v337 = vadd.f32 %v329, 0.75
    %v338 = vadd.f32 %v330, 0.75
    %v339 = vadd.f32 %v331, 0.75
    %v340 = vrsqrt.pop %v316
    %v341 = vmul.f32 %v316, %v340
    %vm342 = vcmp.eq.f32.partialorder %v316, inf
    %v343 = vsel %vm342, %v316, %v341
    %vm344 = vcmp.eq.f32.partialorder %v316, 0.0
    %v345 = vand.u32 %v316, 2147483648
    %v346 = vsel %vm344, %v345, %v343
    %v347 = vrsqrt.pop %v317
    %v348 = vmul.f32 %v317, %v347
    %vm349 = vcmp.eq.f32.partialorder %v317, inf
    %v350 = vsel %vm349, %v317, %v348
    %vm351 = vcmp.eq.f32.partialorder %v317, 0.0
    %v352 = vand.u32 %v317, 2147483648
    %v353 = vsel %vm351, %v352, %v350
    %v354 = vrsqrt.pop %v318
    %v355 = vmul.f32 %v318, %v354
    %vm356 = vcmp.eq.f32.partialorder %v318, inf
    %v357 = vsel %vm356, %v318, %v355
    %vm358 = vcmp.eq.f32.partialorder %v318, 0.0
    %v359 = vand.u32 %v318, 2147483648
    %v360 = vsel %vm358, %v359, %v357
    %v361 = vrsqrt.pop %v319
    %v362 = vmul.f32 %v319, %v361
    %vm363 = vcmp.eq.f32.partialorder %v319, inf
    %v364 = vsel %vm363, %v319, %v362
    %vm365 = vcmp.eq.f32.partialorder %v319, 0.0
    %v366 = vand.u32 %v319, 2147483648
    %v367 = vsel %vm365, %v366, %v364
    %v368 = vrsqrt.pop %v320
    %v369 = vmul.f32 %v320, %v368
    %vm370 = vcmp.eq.f32.partialorder %v320, inf
    %v371 = vsel %vm370, %v320, %v369
    %vm372 = vcmp.eq.f32.partialorder %v320, 0.0
    %v373 = vand.u32 %v320, 2147483648
    %v374 = vsel %vm372, %v373, %v371
    %v375 = vrsqrt.pop %v321
    %v376 = vmul.f32 %v321, %v375
    %vm377 = vcmp.eq.f32.partialorder %v321, inf
    %v378 = vsel %vm377, %v321, %v376
    %vm379 = vcmp.eq.f32.partialorder %v321, 0.0
    %v380 = vand.u32 %v321, 2147483648
    %v381 = vsel %vm379, %v380, %v378
    %v382 = vrsqrt.pop %v322
    %v383 = vmul.f32 %v322, %v382
    %vm384 = vcmp.eq.f32.partialorder %v322, inf
    %v385 = vsel %vm384, %v322, %v383
    %vm386 = vcmp.eq.f32.partialorder %v322, 0.0
    %v387 = vand.u32 %v322, 2147483648
    %v388 = vsel %vm386, %v387, %v385
    %v389 = vrsqrt.pop %v323
    %v390 = vmul.f32 %v323, %v389
    %vm391 = vcmp.eq.f32.partialorder %v323, inf
    %v392 = vsel %vm391, %v323, %v390
    %vm393 = vcmp.eq.f32.partialorder %v323, 0.0
    %v394 = vand.u32 %v323, 2147483648
    %v395 = vsel %vm393, %v394, %v392
    %v396 = vmul.f32 %v316, %v346
    %v397 = vmul.f32 %v317, %v353
    %v398 = vmul.f32 %v318, %v360
    %v399 = vmul.f32 %v319, %v367
    %v400 = vmul.f32 %v320, %v374
    %v401 = vmul.f32 %v321, %v381
    %v402 = vmul.f32 %v322, %v388
    %v403 = vmul.f32 %v323, %v395
    %v404 = vmul.f32 %v332, %v396
    %v405 = vmul.f32 %v333, %v397
    %v406 = vmul.f32 %v334, %v398
    %v407 = vmul.f32 %v335, %v399
    %v408 = vmul.f32 %v336, %v400
    %v409 = vmul.f32 %v337, %v401
    %v410 = vmul.f32 %v338, %v402
    %v411 = vmul.f32 %v339, %v403
    %v412 = vmul.f32 %v220, %v404
    %v413 = vmul.f32 %v221, %v405
    %v414 = vmul.f32 %v222, %v406
    %v415 = vmul.f32 %v223, %v407
    %v416 = vmul.f32 %v224, %v408
    %v417 = vmul.f32 %v225, %v409
    %v418 = vmul.f32 %v226, %v410
    %v419 = vmul.f32 %v227, %v411
    %s420 = sadd.s32 0, 0
    %s421 = smul.u32 %s420, 64
    %s422 = sadd.s32 %s421, 64
    %p423 = scmp.le.s32.totalorder %s422, 16
    // Predicated region
    $region22: #{tpu_custom_call.1} parent=1 // pred_check
      %p424 = pneg %p423
    $region23: #{tpu_custom_call.1} parent=1 // pred_check_branch
      %426 = sbr.rel (%p424) target = $region25
    $region24: #{tpu_custom_call.1} parent=1 // pred_region
      %v427 = vld [vmem:[#allocation2] sm:$0xff]
      %v428 = vld [vmem:[#allocation2 + $0x8] sm:$0xff]
      %v429 = vld [vmem:[#allocation2 + $0x10] sm:$0xff]
      %v430 = vld [vmem:[#allocation2 + $0x18] sm:$0xff]
      %v431 = vld [vmem:[#allocation2 + $0x20] sm:$0xff]
      %v432 = vld [vmem:[#allocation2 + $0x28] sm:$0xff]
      %v433 = vld [vmem:[#allocation2 + $0x30] sm:$0xff]
      %v434 = vld [vmem:[#allocation2 + $0x38] sm:$0xff]
      %v435 = vadd.f32 %v412, 0.0
      %v436 = vadd.f32 %v413, 0.0
      %v437 = vadd.f32 %v414, 0.0
      %v438 = vadd.f32 %v415, 0.0
      %v439 = vadd.f32 %v416, 0.0
      %v440 = vadd.f32 %v417, 0.0
      %v441 = vadd.f32 %v418, 0.0
      %v442 = vadd.f32 %v419, 0.0
      %v443 = vadd.f32 %v427, %v435
      %v444 = vadd.f32 %v428, %v436
      %v445 = vadd.f32 %v429, %v437
      %v446 = vadd.f32 %v430, %v438
      %v447 = vadd.f32 %v431, %v439
      %v448 = vadd.f32 %v432, %v440
      %v449 = vadd.f32 %v433, %v441
      %v450 = vadd.f32 %v434, %v442
      %451 = vst [vmem:[#allocation2] sm:$0xff] %v443
      %452 = vst [vmem:[#allocation2 + $0x8] sm:$0xff] %v444
      %453 = vst [vmem:[#allocation2 + $0x10] sm:$0xff] %v445
      %454 = vst [vmem:[#allocation2 + $0x18] sm:$0xff] %v446
      %455 = vst [vmem:[#allocation2 + $0x20] sm:$0xff] %v447
      %456 = vst [vmem:[#allocation2 + $0x28] sm:$0xff] %v448
      %457 = vst [vmem:[#allocation2 + $0x30] sm:$0xff] %v449
      %458 = vst [vmem:[#allocation2 + $0x38] sm:$0xff] %v450
    $region25: #{tpu_custom_call.1} parent=1 // pred_fallthru
      _
    %p459 = scmp.lt.s32.totalorder %s421, 16
    %p460 = scmp.gt.s32.totalorder %s422, 16
    %p461 = pnand %p459, %p460
    %p462 = pneg %p461
    // Predicated region
    $region26: #{tpu_custom_call.1} parent=1 // pred_check
      _
    $region27: #{tpu_custom_call.1} parent=1 // pred_check_branch
      %464 = sbr.rel (%p461) target = $region29
    $region28: #{tpu_custom_call.1} parent=1 // pred_region
      %v465 = vlaneseq
      %v466 = vshrl.u32 %v465, 7
      %v467 = vadd.s32 %v466, 8
      %v468 = vadd.s32 %v466, 16
      %v469 = vadd.s32 %v466, 24
      %v470 = vadd.s32 %v466, 32
      %v471 = vadd.s32 %v466, 40
      %v472 = vadd.s32 %v466, 48
      %v473 = vadd.s32 %v466, 56
      %s474 = ssub.s32 16, %s421
      %v475 = vstv %s474
      %vm476 = vcmp.lt.s32.totalorder %v466, %v475
      %vm477 = vcmp.lt.s32.totalorder %v467, %v475
      %vm478 = vcmp.lt.s32.totalorder %v468, %v475
      %vm479 = vcmp.lt.s32.totalorder %v469, %v475
      %vm480 = vcmp.lt.s32.totalorder %v470, %v475
      %vm481 = vcmp.lt.s32.totalorder %v471, %v475
      %vm482 = vcmp.lt.s32.totalorder %v472, %v475
      %vm483 = vcmp.lt.s32.totalorder %v473, %v475
      %v484 = vsel %vm476, %v412, 0.0
      %v485 = vsel %vm477, %v413, 0.0
      %v486 = vsel %vm478, %v414, 0.0
      %v487 = vsel %vm479, %v415, 0.0
      %v488 = vsel %vm480, %v416, 0.0
      %v489 = vsel %vm481, %v417, 0.0
      %v490 = vsel %vm482, %v418, 0.0
      %v491 = vsel %vm483, %v419, 0.0
      %v492 = vld [vmem:[#allocation2] sm:$0xff]
      %v493 = vld [vmem:[#allocation2 + $0x8] sm:$0xff]
      %v494 = vld [vmem:[#allocation2 + $0x10] sm:$0xff]
      %v495 = vld [vmem:[#allocation2 + $0x18] sm:$0xff]
      %v496 = vld [vmem:[#allocation2 + $0x20] sm:$0xff]
      %v497 = vld [vmem:[#allocation2 + $0x28] sm:$0xff]
      %v498 = vld [vmem:[#allocation2 + $0x30] sm:$0xff]
      %v499 = vld [vmem:[#allocation2 + $0x38] sm:$0xff]
      %v500 = vadd.f32 %v484, 0.0
      %v501 = vadd.f32 %v485, 0.0
      %v502 = vadd.f32 %v486, 0.0
      %v503 = vadd.f32 %v487, 0.0
      %v504 = vadd.f32 %v488, 0.0
      %v505 = vadd.f32 %v489, 0.0
      %v506 = vadd.f32 %v490, 0.0
      %v507 = vadd.f32 %v491, 0.0
      %v508 = vadd.f32 %v492, %v500
      %v509 = vadd.f32 %v493, %v501
      %v510 = vadd.f32 %v494, %v502
      %v511 = vadd.f32 %v495, %v503
      %v512 = vadd.f32 %v496, %v504
      %v513 = vadd.f32 %v497, %v505
      %v514 = vadd.f32 %v498, %v506
      %v515 = vadd.f32 %v499, %v507
      %516 = vst [vmem:[#allocation2] sm:$0xff] %v508
      %517 = vst [vmem:[#allocation2 + $0x8] sm:$0xff] %v509
      %518 = vst [vmem:[#allocation2 + $0x10] sm:$0xff] %v510
      %519 = vst [vmem:[#allocation2 + $0x18] sm:$0xff] %v511
      %520 = vst [vmem:[#allocation2 + $0x20] sm:$0xff] %v512
      %521 = vst [vmem:[#allocation2 + $0x28] sm:$0xff] %v513
      %522 = vst [vmem:[#allocation2 + $0x30] sm:$0xff] %v514
      %523 = vst [vmem:[#allocation2 + $0x38] sm:$0xff] %v515
    $region29: #{tpu_custom_call.1} parent=1 // pred_fallthru
      _
    // Predicated region
    $region30: #{tpu_custom_call.1} parent=1 // pred_check
      %p524 = pneg %p64
    $region31: #{tpu_custom_call.1} parent=1 // pred_check_branch
      %526 = sbr.rel (%p524) target = $region33
    $region32: #{tpu_custom_call.1} parent=1 // pred_region
      %v527 = vld [vmem:[#allocation2] sm:$0xff]
      %v528 = vld [vmem:[#allocation2 + $0x8] sm:$0xff]
      %v529 = vld [vmem:[#allocation2 + $0x10] sm:$0xff]
      %v530 = vld [vmem:[#allocation2 + $0x18] sm:$0xff]
      %v531 = vld [vmem:[#allocation2 + $0x20] sm:$0xff]
      %v532 = vld [vmem:[#allocation2 + $0x28] sm:$0xff]
      %v533 = vld [vmem:[#allocation2 + $0x30] sm:$0xff]
      %v534 = vld [vmem:[#allocation2 + $0x38] sm:$0xff]
      %535 = vst [vmem:[#allocation8] sm:$0xff] %v527
      %536 = vst [vmem:[#allocation8 + $0x8] sm:$0xff] %v528
      %537 = vst [vmem:[#allocation8 + $0x10] sm:$0xff] %v529
      %538 = vst [vmem:[#allocation8 + $0x18] sm:$0xff] %v530
      %539 = vst [vmem:[#allocation8 + $0x20] sm:$0xff] %v531
      %540 = vst [vmem:[#allocation8 + $0x28] sm:$0xff] %v532
      %541 = vst [vmem:[#allocation8 + $0x30] sm:$0xff] %v533
      %542 = vst [vmem:[#allocation8 + $0x38] sm:$0xff] %v534
    $region33: #{tpu_custom_call.1} parent=1 // pred_fallthru
      _
    // Predicated region
    $region34: #{tpu_custom_call.1} parent=1 // pred_check
      _
    $region35: #{tpu_custom_call.1} parent=1 // pred_check_branch
      %544 = sbr.rel (0) target = $region37
    $region36: #{tpu_custom_call.1} parent=1 // pred_region
      %s546 = ssub.s32 1024, 1024
      %547 = vsyncadd [#allocation5], %s546
      %s548 = sshll.u32 [#allocation8], 4
      %s549 = int_to_ptr.vmem [resolvable:$true] %s548
      %554 = dma.vmem_to_hbm [thread:$0]  %s549, 1024, %s2, [#allocation5], 128, 128, 8
    $region37: #{tpu_custom_call.1} parent=1 // pred_fallthru
      _
    // Predicated region
    $region38: #{tpu_custom_call.1} parent=1 // pred_check
      _
    $region39: #{tpu_custom_call.1} parent=1 // pred_check_branch
      %556 = sbr.rel (0) target = $region41
    $region40: #{tpu_custom_call.1} parent=1 // pred_region
      %557 = dma.done [#allocation5], 1024
    $region41: #{tpu_custom_call.1} parent=1 // pred_fallthru
      _
    %558 = vsyncpa [#allocation4], 1
    %559 = vsyncpa [#allocation7], 1
    %560 = vsyncpa [#allocation5], 1

</llo_original>
